<compile_context>
chip_gen: v7x
topology: tpu7x:2x2x1
jax: 0.10.0
libtpu: 0.0.40
codegen_flags: <defaults>
</compile_context>

<pallas_src>
import functools

import jax
import jax.numpy as jnp
from jax.experimental import pallas as pl
from jax.experimental.pallas import tpu as pltpu


def _competing_head_kernel(pooled_ref, supp_ref, w_ref, nm_ref, out_ref,
                           *, apply_rotation, num_hyp, num_classes):
    """pooled_ref: [tb, D]; supp_ref: [1, D] (pooled dtype); w_ref: [D, H*C];
    nm_ref: SMEM [1] f32; out_ref: [tb, C]."""
    pooled = pooled_ref[...]

    if apply_rotation:
        # Single elementwise multiply in the streaming dtype; supp was
        # precomputed and pre-cast in the wrapper ([1, D] broadcasts over rows).
        pooled = pooled * supp_ref[...]

    # MXU operands in the weight dtype (no-op when dtypes already match).
    pooled = pooled.astype(w_ref.dtype)

    # Single fused MXU dot over all hypotheses: [tb, D] x [D, H*C] -> [tb, H*C],
    # accumulated in f32.
    logits = jnp.dot(pooled, w_ref[...], preferred_element_type=jnp.float32)

    # Max over hypotheses via H-1 maximums on static lane slices (cheap VPU work).
    acc = logits[:, 0:num_classes]
    for h in range(1, num_hyp):
        acc = jnp.maximum(acc, logits[:, h * num_classes:(h + 1) * num_classes])

    out_ref[...] = (acc * nm_ref[0]).astype(out_ref.dtype)


def prepare_weight(weight):
    """One-time re-layout of the classifier weight: [C, H, D] -> [D, H*C]
    (column index = h*C + c).  Do this once at parameter-load / update time and
    reuse across forward calls instead of transposing per call."""
    C, H, D = weight.shape
    return jnp.transpose(weight, (2, 1, 0)).reshape(D, H * C)


def _choose_batch_tile(B, max_tile=1024):
    """Large batch tiles amortize the ~0.35us per-grid-step overhead.  For
    B <= max_tile aim for >= 2 grid steps (v7x has two TensorCores on the
    'parallel' axis): tb = round_up(cdiv(B, 2), 8).  Tiny batches use one full
    block (block dim == array dim is always legal)."""
    if B > max_tile:
        return max_tile
    if B >= 16:
        half = -(-B // 2)                      # cdiv(B, 2)
        return ((half + 7) // 8) * 8
    return B


def competing_head_with_rotation(pooled, w_dhc, norm_mult, cooldown_timers, *,
                                 num_classes, num_hypotheses,
                                 tau=5.0, training=True, rotation_enabled=True,
                                 max_block_b=1024):
    """pooled: [B, D] (f32 or bf16); w_dhc: [D, H*C] from prepare_weight();
    norm_mult: [1]; cooldown_timers: [D].  Returns logits [B, C] in pooled.dtype."""
    B, D = pooled.shape
    HC = num_hypotheses * num_classes
    assert w_dhc.shape == (D, HC), (w_dhc.shape, (D, HC))

    apply_rotation = bool(training and rotation_enabled)

    # Batch tiling: no wrapper pad; Pallas masks the ragged last block.
    tb = _choose_batch_tile(B, max_block_b)
    nb = pl.cdiv(B, tb)

    # Hoisted suppression vector (computed once over D elements, not per tile),
    # cast once to the streaming dtype so the in-kernel multiply stays in the
    # operand dtype (important for bf16 on v6e/v7x bf16 VALUs).
    if apply_rotation:
        supp = 1.0 - jnp.exp(cooldown_timers.astype(jnp.float32) * (-1.0 / float(tau)))
    else:
        supp = jnp.ones((D,), dtype=jnp.float32)   # unused (compiled out)
    supp_2d = supp.reshape(1, D).astype(pooled.dtype)

    nm = norm_mult.reshape(1).astype(jnp.float32)

    kernel = functools.partial(
        _competing_head_kernel,
        apply_rotation=apply_rotation,
        num_hyp=num_hypotheses,
        num_classes=num_classes,
    )

    grid_spec = pltpu.PrefetchScalarGridSpec(
        num_scalar_prefetch=0,
        grid=(nb,),
        in_specs=[
            pl.BlockSpec((tb, D), lambda i: (i, 0)),             # pooled tile (pipelined)
            pl.BlockSpec((1, D), lambda i: (0, 0)),              # suppression vector (resident)
            pl.BlockSpec((D, HC), lambda i: (0, 0)),             # fused weight (resident)
            pl.BlockSpec(memory_space=pltpu.MemorySpace.SMEM),   # norm multiplier scalar
        ],
        out_specs=pl.BlockSpec((tb, num_classes), lambda i: (i, 0)),
    )

    itemsize = lambda a: a.dtype.itemsize
    cost = pl.CostEstimate(
        flops=2 * B * HC * D,
        transcendentals=0,                       # exp hoisted into the wrapper
        bytes_accessed=int(pooled.size * itemsize(pooled)
                           + w_dhc.size * itemsize(w_dhc)
                           + supp_2d.size * itemsize(supp_2d)
                           + B * num_classes * itemsize(pooled)),
    )

    return pl.pallas_call(
        kernel,
        out_shape=jax.ShapeDtypeStruct((B, num_classes), pooled.dtype),
        grid_spec=grid_spec,
        compiler_params=pltpu.CompilerParams(
            dimension_semantics=("parallel",)),
        cost_estimate=cost,
    )(pooled, supp_2d, w_dhc, nm)


def _reference(pooled, weight, norm_mult, cooldown, *, tau, training, rotation_enabled):
    p = pooled.astype(jnp.float32)
    if training and rotation_enabled:
        supp = 1.0 - jnp.exp(-cooldown.astype(jnp.float32) / tau)
        p = p * supp[None, :]
    logits = jnp.einsum('bd,chd->bch', p, weight.astype(jnp.float32))
    logits = jnp.max(logits, axis=2)
    return logits * norm_mult[0]


if __name__ == "__main__":
    key = jax.random.PRNGKey(0)
    k_w, k_p, k_c = jax.random.split(key, 3)

    num_classes = 10
    num_prototypes = 128
    num_hypotheses = 3
    tau = 5.0

    # Parameters (matching the module __init__ shapes).
    weight = 0.01 * jax.random.normal(
        k_w, (num_classes, num_hypotheses, num_prototypes), dtype=jnp.float32)
    norm_mult = jnp.array([1.0], dtype=jnp.float32)
    cooldown_zero = jnp.zeros((num_prototypes,), dtype=jnp.float32)
    cooldown_warm = jax.random.uniform(k_c, (num_prototypes,), dtype=jnp.float32) * 10.0

    # One-time kernel-friendly weight layout, reused across forward calls.
    w_dhc = prepare_weight(weight)

    ok = True

    # f32 path: even and ragged batch tiling, warm/fresh cooldown, train/eval.
    for batch, cooldown, training in [
        (256, cooldown_warm, True),    # 2 parallel grid steps, rotation active
        (200, cooldown_warm, True),    # ragged last block (no wrapper pad copy)
        (256, cooldown_zero, True),    # fresh cooldown buffer -> full suppression
        (256, cooldown_zero, False),   # eval mode (rotation bypassed)
    ]:
        pooled = jax.random.uniform(jax.random.fold_in(k_p, batch),
                                    (batch, num_prototypes), dtype=jnp.float32)
        out = competing_head_with_rotation(
            pooled, w_dhc, norm_mult, cooldown,
            num_classes=num_classes, num_hypotheses=num_hypotheses,
            tau=tau, training=training, rotation_enabled=True)
        out = jax.block_until_ready(out)
        ref = _reference(pooled, weight, norm_mult, cooldown,
                         tau=tau, training=training, rotation_enabled=True)
        ok = ok and bool(jnp.allclose(out, ref, atol=1e-5, rtol=1e-5))

    # bf16 streaming path (halves HBM traffic; f32 MXU accumulation).  The
    # suppressed activations are rounded to bf16 before the dot, so compare
    # against the bf16-rounded-input reference with a loose tolerance.
    pooled_f32 = jax.random.uniform(k_p, (256, num_prototypes), dtype=jnp.float32)
    pooled_bf = pooled_f32.astype(jnp.bfloat16)
    w_dhc_bf = w_dhc.astype(jnp.bfloat16)
    out_bf = competing_head_with_rotation(
        pooled_bf, w_dhc_bf, norm_mult, cooldown_warm,
        num_classes=num_classes, num_hypotheses=num_hypotheses,
        tau=tau, training=True, rotation_enabled=True)
    out_bf = jax.block_until_ready(out_bf)
    ref_bf = _reference(pooled_bf.astype(jnp.float32), weight.astype(jnp.bfloat16),
                        norm_mult, cooldown_warm,
                        tau=tau, training=True, rotation_enabled=True)
    ok = ok and bool(jnp.allclose(out_bf.astype(jnp.float32), ref_bf,
                                  atol=1e-2, rtol=5e-2))

    print("KERNEL_OK" if ok else "KERNEL_MISMATCH")
</pallas_src>

<mosaic_0001>
module attributes {stable_mosaic.version = 11 : i64} {
  func.func @_competing_head_kernel(%arg0: i32, %arg1: memref<128x128xf32, #tpu.memory_space<vmem>>, %arg2: memref<1x128xf32, #tpu.memory_space<vmem>>, %arg3: memref<128x30xf32, #tpu.memory_space<vmem>>, %arg4: memref<1xf32, #tpu.memory_space<smem>>, %arg5: memref<128x10xf32, #tpu.memory_space<vmem>>) attributes {dimension_semantics = [#tpu.dimension_semantics<parallel>], iteration_bounds = array<i64: 2>, scalar_prefetch = 0 : i64, scratch_operands = 0 : i64, tpu.core_type = #tpu.core_type<tc>, window_params = [{transform_indices = @transform_0, window_bounds = array<i64: 128, 128>}, {pipeline_mode = #tpu.pipeline_mode<synchronous>, transform_indices = @transform_1, window_bounds = array<i64: 1, 128>}, {pipeline_mode = #tpu.pipeline_mode<synchronous>, transform_indices = @transform_2, window_bounds = array<i64: 128, 30>}, {transform_indices = @transform_3, window_bounds = array<i64: 1>}, {transform_indices = @transform_4, window_bounds = array<i64: 128, 10>}]} {
    %c0 = arith.constant 0 : index
    %c0_0 = arith.constant 0 : index
    %0 = vector.load %arg1[%c0, %c0_0] : memref<128x128xf32, #tpu.memory_space<vmem>>, vector<128x128xf32>
    %c0_1 = arith.constant 0 : index
    %c0_2 = arith.constant 0 : index
    %1 = vector.load %arg2[%c0_1, %c0_2] : memref<1x128xf32, #tpu.memory_space<vmem>>, vector<1x128xf32>
    %2 = vector.broadcast %1 : vector<1x128xf32> to vector<128x128xf32>
    %3 = arith.mulf %0, %2 : vector<128x128xf32>
    %c0_3 = arith.constant 0 : index
    %c0_4 = arith.constant 0 : index
    %4 = vector.load %arg3[%c0_3, %c0_4] : memref<128x30xf32, #tpu.memory_space<vmem>>, vector<128x30xf32>
    %cst = arith.constant dense<0.000000e+00> : vector<128x30xf32>
    %5 = tpu.matmul %3, %4, %cst {dimension_numbers = #tpu.dot_dimension_numbers<[1], [0], [0], [1], [0, 0, 1, 1], [], []>} : vector<128x128xf32>, vector<128x30xf32>, vector<128x30xf32> -> vector<128x30xf32>
    %6 = vector.extract_strided_slice %5 {offsets = [0, 0], sizes = [128, 10], strides = [1, 1]} : vector<128x30xf32> to vector<128x10xf32>
    %7 = vector.extract_strided_slice %5 {offsets = [0, 10], sizes = [128, 10], strides = [1, 1]} : vector<128x30xf32> to vector<128x10xf32>
    %8 = arith.maximumf %6, %7 : vector<128x10xf32>
    %9 = vector.extract_strided_slice %5 {offsets = [0, 20], sizes = [128, 10], strides = [1, 1]} : vector<128x30xf32> to vector<128x10xf32>
    %10 = arith.maximumf %8, %9 : vector<128x10xf32>
    %c0_5 = arith.constant 0 : index
    %11 = memref.load %arg4[%c0_5] : memref<1xf32, #tpu.memory_space<smem>>
    %12 = vector.broadcast %11 : f32 to vector<128x10xf32>
    %13 = arith.mulf %10, %12 : vector<128x10xf32>
    %c0_6 = arith.constant 0 : index
    %c0_7 = arith.constant 0 : index
    %14 = vector.load %arg5[%c0_6, %c0_7] : memref<128x10xf32, #tpu.memory_space<vmem>>, vector<128x10xf32>
    tpu.vector_store %arg5[%c0_6, %c0_7], %13 {strides = array<i32>} : memref<128x10xf32, #tpu.memory_space<vmem>>, vector<128x10xf32>,
    return
  }
  func.func @transform_0(%arg0: i32) -> (i32, i32) {
    %c0_i32 = arith.constant 0 : i32
    %c0_i32_0 = arith.constant 0 : i32
    return %arg0, %c0_i32 : i32, i32
  }
  func.func @transform_1(%arg0: i32) -> (i32, i32) {
    %c0_i32 = arith.constant 0 : i32
    %c0_i32_0 = arith.constant 0 : i32
    %c0_i32_1 = arith.constant 0 : i32
    return %c0_i32, %c0_i32_0 : i32, i32
  }
  func.func @transform_2(%arg0: i32) -> (i32, i32) {
    %c0_i32 = arith.constant 0 : i32
    %c0_i32_0 = arith.constant 0 : i32
    %c0_i32_1 = arith.constant 0 : i32
    return %c0_i32, %c0_i32_0 : i32, i32
  }
  func.func @transform_3(%arg0: i32) -> i32 {
    %c0_i32 = arith.constant 0 : i32
    %c0_i32_0 = arith.constant 0 : i32
    return %c0_i32 : i32
  }
  func.func @transform_4(%arg0: i32) -> (i32, i32) {
    %c0_i32 = arith.constant 0 : i32
    %c0_i32_0 = arith.constant 0 : i32
    return %arg0, %c0_i32 : i32, i32
  }
}

</mosaic_0001>

<llo_original>
// kernel: tpu_custom_call.1
$region0: #{tpu_custom_call.1}
  #allocation0 [shape = 'u32[]', space=smem, size = 0x4, offset = 0x4, fixed_abs, tag = 'smem constant byte address 0x4 - core index']
  #allocation1 [shape = 'u32[144,128]{1,0:T(1,128)}', space=vmem, size = 0x12000, scoped, tag = 'internal scratch']
  #allocation2 [shape = 'f32[1]{0:T(128)S(6)}', space=smem, size = 0x200, scoped, tag = 'scoped memory for tpu_custom_call.1']
  %s0 = inlined_call_operand.hbm [shape: f32[256,128], index: 0, kind: input, shape index: {}]
  %s1 = inlined_call_operand.vmem [shape: f32[1,128], index: 1, kind: input, shape index: {}]
  %s2 = inlined_call_operand.vmem [shape: f32[128,30], index: 2, kind: input, shape index: {}]
  %s3 = inlined_call_operand.<no memory space> [shape: f32[1], index: 3, kind: input, shape index: {}]
  %s4 = inlined_call_operand.vmem [shape: f32[256,10], index: 4, kind: output, shape index: {}]
  %s5 = sld [smem:[#allocation0]]
  $region53: #{tpu_custom_call.1} parent=0
    _
  %s7 = ssub.s32 1, %s5
  %s8 = scalar_select 0, %s7, %s5
  %9 = sst [smem:[#allocation2]] %s3
  $region1: #{tpu_custom_call.1} parent=0
    #allocation3 [shape = 'u8[131072]{0}', space=vmem, size = 0x20000, scoped, tag = 'input window, operand 0']
    #allocation4 [shape = 's32[2]{0}', space=sflag, size = 0x8, scoped, tag = 'scoped memory for tpu_custom_call.1']
    %10 = vsyncpa [#allocation4], 0
    %s11 = scalar_lea.sflag [#allocation4], 1
    %12 = vsyncpa %s11, 0
    loop: start=0, step=1, limit=4
    $region2: #{tpu_custom_call.1} parent=1 // loop_pre_header
      _
    $region3: #{tpu_custom_call.1} parent=1 // loop_header
      %s14 = sphi 0, %s18
      %p15 = scmp.ge.s32.totalorder %s14, 4
      %s24 = sphi 0, %s26
      %s27 = sphi 0, %s24
      %s28 = sphi 0, %s27
      %s44 = sphi 0, %s28
      %s48 = sphi 0, %s48
      %s50 = sphi 0, %s48
      %s51 = sphi 0, %s50
      %s65 = sphi 0, %s51
      %s69 = sphi 0, %s69
      %s71 = sphi 0, %s69
      %s72 = sphi 0, %s71
      %s86 = sphi 0, %s72
      %s90 = sphi 0, %s90
      %s92 = sphi 0, %s90
      %s93 = sphi 0, %s92
      %s107 = sphi 0, %s93
      %s113 = sphi 0, %s115
      %s116 = sphi 0, %s113
      %s117 = sphi 0, %s116
      %s133 = sphi 0, %s117
    $region4: #{tpu_custom_call.1} parent=1 // loop_header_branch
      %17 = sbr.rel (%p15) target = $region8
    $region5: #{tpu_custom_call.1} parent=1 // loop_body
      %s19 = ssub.s32 %s14, 1
      %s20 = ssub.s32 %s14, 2
      %s21 = sadd.s32 %s14, 1
      %s22 = ssub.s32 %s14, %s21
      %p23 = scmp.eq.s32.totalorder %s22, 0
      %s25 = sadd.s32 %s24, 1
      %s26 = scalar_select %p23, %s24, %s25
      %p29 = pneg %p23
      %p30 = scmp.eq.s32.totalorder %s14, 1
      %p31 = por %p29, %p30
      %p32 = scmp.ne.s32.totalorder %s24, %s27
      %p33 = scmp.eq.s32.totalorder %s14, 0
      %p34 = por %p32, %p33
      %p35 = scmp.ne.s32.totalorder %s24, %s27
      %p36 = scmp.eq.s32.totalorder %s19, 1
      %p37 = por %p35, %p36
      %p38 = scmp.ne.s32.totalorder %s27, %s28
      %p39 = scmp.eq.s32.totalorder %s19, 0
      %p40 = por %p38, %p39
      %p41 = scmp.ne.s32.totalorder %s27, %s28
      %p42 = scmp.eq.s32.totalorder %s20, 1
      %p43 = por %p41, %p42
      %p45 = scmp.ne.s32.totalorder %s28, %s44
      %p46 = scmp.eq.s32.totalorder %s20, 0
      %p47 = por %p45, %p46
      %s49 = sadd.s32 %s48, 1
      %p52 = scmp.eq.s32.totalorder %s14, 1
      %p53 = scmp.ne.s32.totalorder %s48, %s50
      %p54 = scmp.eq.s32.totalorder %s14, 0
      %p55 = por %p53, %p54
      %p56 = scmp.ne.s32.totalorder %s48, %s50
      %p57 = scmp.eq.s32.totalorder %s19, 1
      %p58 = por %p56, %p57
      %p59 = scmp.ne.s32.totalorder %s50, %s51
      %p60 = scmp.eq.s32.totalorder %s19, 0
      %p61 = por %p59, %p60
      %p62 = scmp.ne.s32.totalorder %s50, %s51
      %p63 = scmp.eq.s32.totalorder %s20, 1
      %p64 = por %p62, %p63
      %p66 = scmp.ne.s32.totalorder %s51, %s65
      %p67 = scmp.eq.s32.totalorder %s20, 0
      %p68 = por %p66, %p67
      %s70 = sadd.s32 %s69, 1
      %p73 = scmp.eq.s32.totalorder %s14, 1
      %p74 = scmp.ne.s32.totalorder %s69, %s71
      %p75 = scmp.eq.s32.totalorder %s14, 0
      %p76 = por %p74, %p75
      %p77 = scmp.ne.s32.totalorder %s69, %s71
      %p78 = scmp.eq.s32.totalorder %s19, 1
      %p79 = por %p77, %p78
      %p80 = scmp.ne.s32.totalorder %s71, %s72
      %p81 = scmp.eq.s32.totalorder %s19, 0
      %p82 = por %p80, %p81
      %p83 = scmp.ne.s32.totalorder %s71, %s72
      %p84 = scmp.eq.s32.totalorder %s20, 1
      %p85 = por %p83, %p84
      %p87 = scmp.ne.s32.totalorder %s72, %s86
      %p88 = scmp.eq.s32.totalorder %s20, 0
      %p89 = por %p87, %p88
      %s91 = sadd.s32 %s90, 1
      %p94 = scmp.eq.s32.totalorder %s14, 1
      %p95 = scmp.ne.s32.totalorder %s90, %s92
      %p96 = scmp.eq.s32.totalorder %s14, 0
      %p97 = por %p95, %p96
      %p98 = scmp.ne.s32.totalorder %s90, %s92
      %p99 = scmp.eq.s32.totalorder %s19, 1
      %p100 = por %p98, %p99
      %p101 = scmp.ne.s32.totalorder %s92, %s93
      %p102 = scmp.eq.s32.totalorder %s19, 0
      %p103 = por %p101, %p102
      %p104 = scmp.ne.s32.totalorder %s92, %s93
      %p105 = scmp.eq.s32.totalorder %s20, 1
      %p106 = por %p104, %p105
      %p108 = scmp.ne.s32.totalorder %s93, %s107
      %p109 = scmp.eq.s32.totalorder %s20, 0
      %p110 = por %p108, %p109
      %s111 = ssub.s32 %s14, %s21
      %p112 = scmp.eq.s32.totalorder %s111, 0
      %s114 = sadd.s32 %s113, 1
      %s115 = scalar_select %p112, %s113, %s114
      %p118 = pneg %p112
      %p119 = scmp.eq.s32.totalorder %s14, 1
      %p120 = por %p118, %p119
      %p121 = scmp.ne.s32.totalorder %s113, %s116
      %p122 = scmp.eq.s32.totalorder %s14, 0
      %p123 = por %p121, %p122
      %p124 = scmp.ne.s32.totalorder %s113, %s116
      %p125 = scmp.eq.s32.totalorder %s19, 1
      %p126 = por %p124, %p125
      %p127 = scmp.ne.s32.totalorder %s116, %s117
      %p128 = scmp.eq.s32.totalorder %s19, 0
      %p129 = por %p127, %p128
      %p130 = scmp.ne.s32.totalorder %s116, %s117
      %p131 = scmp.eq.s32.totalorder %s20, 1
      %p132 = por %p130, %p131
      %p134 = scmp.ne.s32.totalorder %s117, %s133
      %p135 = scmp.eq.s32.totalorder %s20, 0
      %p136 = por %p134, %p135
      %p137 = scmp.le.s32.totalorder 1, %s14
      %p138 = scmp.lt.s32.totalorder %s14, 3
      %p139 = pnand %p137, %p138
      %p140 = pneg %p139
      // Predicated region
      $region9: #{tpu_custom_call.1} parent=5 // pred_check
        _
      $region10: #{tpu_custom_call.1} parent=5 // pred_check_branch
        %142 = sbr.rel (%p139) target = $region12
      $region11: #{tpu_custom_call.1} parent=5 // pred_region
        %s143 = ssub.s32 %s14, 1
        // Predicated region
        $region13: #{tpu_custom_call.1} parent=11 // pred_check
          %p144 = pneg %p61
        $region14: #{tpu_custom_call.1} parent=11 // pred_check_branch
          %146 = sbr.rel (%p144) target = $region16
        $region15: #{tpu_custom_call.1} parent=11 // pred_region
          _
        $region16: #{tpu_custom_call.1} parent=11 // pred_fallthru
          _
        // Predicated region
        $region17: #{tpu_custom_call.1} parent=11 // pred_check
          %p147 = pneg %p82
        $region18: #{tpu_custom_call.1} parent=11 // pred_check_branch
          %149 = sbr.rel (%p147) target = $region20
        $region19: #{tpu_custom_call.1} parent=11 // pred_region
          _
        $region20: #{tpu_custom_call.1} parent=11 // pred_fallthru
          _
        // Predicated region
        $region21: #{tpu_custom_call.1} parent=11 // pred_check
          %p150 = pneg %p103
        $region22: #{tpu_custom_call.1} parent=11 // pred_check_branch
          %152 = sbr.rel (%p150) target = $region24
        $region23: #{tpu_custom_call.1} parent=11 // pred_region
          _
        $region24: #{tpu_custom_call.1} parent=11 // pred_fallthru
          _
      $region12: #{tpu_custom_call.1} parent=5 // pred_fallthru
        _
      %p153 = scmp.lt.s32.totalorder %s14, 2
      // Predicated region
      $region25: #{tpu_custom_call.1} parent=5 // pred_check
        %p154 = pneg %p153
      $region26: #{tpu_custom_call.1} parent=5 // pred_check_branch
        %156 = sbr.rel (%p154) target = $region28
      $region27: #{tpu_custom_call.1} parent=5 // pred_region
        // Predicated region
        $region29: #{tpu_custom_call.1} parent=27 // pred_check
          %p157 = pneg %p34
        $region30: #{tpu_custom_call.1} parent=27 // pred_check_branch
          %159 = sbr.rel (%p157) target = $region32
        $region31: #{tpu_custom_call.1} parent=27 // pred_region
          %s160 = sand.u32 %s24, 1
          %s161 = scalar_lea.sflag [#allocation4], %s160
          %s162 = sand.u32 %s24, 1
          %s163 = smul.addr %s162, 128
          %s164 = scalar_lea.vmem [#allocation3], %s163
          %s165 = smul.u32 16, %s14
          %s167 = ssub.s32 2048, 2048
          %168 = vsyncadd %s161, %s167
          %s169 = smul.addr %s165, 128
          %s170 = scalar_lea.hbm %s0, %s169
          %s171 = sshll.u32 %s164, 4
          %s172 = int_to_ptr.vmem [resolvable:$true] %s171
          %177 = dma.hbm_to_vmem [thread:$0]  %s170, 2048, %s172, %s161, 128, 128, 8
        $region32: #{tpu_custom_call.1} parent=27 // pred_fallthru
          _
      $region28: #{tpu_custom_call.1} parent=5 // pred_fallthru
        _
      %p178 = scmp.le.s32.totalorder 1, %s14
      %p179 = scmp.lt.s32.totalorder %s14, 3
      %p180 = pnand %p178, %p179
      %p181 = pneg %p180
      // Predicated region
      $region33: #{tpu_custom_call.1} parent=5 // pred_check
        _
      $region34: #{tpu_custom_call.1} parent=5 // pred_check_branch
        %183 = sbr.rel (%p180) target = $region36
      $region35: #{tpu_custom_call.1} parent=5 // pred_region
        %s184 = ssub.s32 %s14, 1
        %s185 = sand.u32 %s27, 1
        %s186 = scalar_lea.sflag [#allocation4], %s185
        %s187 = sand.u32 %s27, 1
        %s188 = smul.addr %s187, 128
        %s189 = scalar_lea.vmem [#allocation3], %s188
        // Predicated region
        $region37: #{tpu_custom_call.1} parent=35 // pred_check
          %p190 = pneg %p40
        $region38: #{tpu_custom_call.1} parent=35 // pred_check_branch
          %192 = sbr.rel (%p190) target = $region40
        $region39: #{tpu_custom_call.1} parent=35 // pred_region
          %193 = dma.done %s186, 2048
        $region40: #{tpu_custom_call.1} parent=35 // pred_fallthru
          _
        %s194 = sand.u32 %s27, 1
        %s195 = scalar_lea.sflag [#allocation4], %s194
        %s196 = sand.u32 %s27, 1
        %s197 = smul.addr %s196, 128
        %s198 = scalar_lea.vmem [#allocation3], %s197
        %p199 = pneg %p40
        %p200 = pneg %p37
        %p201 = pneg %p61
        %p202 = pneg %p58
        %p203 = pneg %p82
        %p204 = pneg %p79
        %p205 = pneg %p103
        %p206 = pneg %p100
        %p207 = pneg %p129
        %p208 = pneg %p126
        %s209 = smul.u32 16, %s19
        %p210 = scmp.lt.s32.totalorder %s209, 31
        %s211 = scalar_select %p210, %s209, 31
        %s212 = smul.addr %s211, 8
        %s213 = scalar_lea.vmem %s4, %s212
        %s214 = smul.u32 16, %s19
        %s215 = smul.u32 16, %s19
        %p216 = scmp.lt.s32.totalorder %s215, 31
        %s217 = scalar_select %p216, %s215, 31
        %s218 = smul.addr %s217, 8
        %s219 = scalar_lea.vmem %s4, %s218
        %s220 = smul.u32 16, %s19
        %v221 = vld [vmem:[%s189] sm:$0xff]
        %v222 = vld [vmem:[%s189 + $0x8] sm:$0xff]
        %v223 = vld [vmem:[%s189 + $0x10] sm:$0xff]
        %v224 = vld [vmem:[%s189 + $0x18] sm:$0xff]
        %v225 = vld [vmem:[%s189 + $0x20] sm:$0xff]
        %v226 = vld [vmem:[%s189 + $0x28] sm:$0xff]
        %v227 = vld [vmem:[%s189 + $0x30] sm:$0xff]
        %v228 = vld [vmem:[%s189 + $0x38] sm:$0xff]
        %v229 = vld [vmem:[%s189 + $0x40] sm:$0xff]
        %v230 = vld [vmem:[%s189 + $0x48] sm:$0xff]
        %v231 = vld [vmem:[%s189 + $0x50] sm:$0xff]
        %v232 = vld [vmem:[%s189 + $0x58] sm:$0xff]
        %v233 = vld [vmem:[%s189 + $0x60] sm:$0xff]
        %v234 = vld [vmem:[%s189 + $0x68] sm:$0xff]
        %v235 = vld [vmem:[%s189 + $0x70] sm:$0xff]
        %v236 = vld [vmem:[%s189 + $0x78] sm:$0xff]
        %v237 = vld [vmem:[%s1] sm:$0x1]
        %v239 = vlaneseq
        %v240 = vshrl.u32 %v239, 7
        %v241 = vsub.s32 0, %v240
        %v242 = vrot.slane %v237, %v241
        %v244 = vmul.f32 %v221, %v242
        %v245 = vmul.f32 %v222, %v242
        %v246 = vmul.f32 %v223, %v242
        %v247 = vmul.f32 %v224, %v242
        %v248 = vmul.f32 %v225, %v242
        %v249 = vmul.f32 %v226, %v242
        %v250 = vmul.f32 %v227, %v242
        %v251 = vmul.f32 %v228, %v242
        %v252 = vmul.f32 %v229, %v242
        %v253 = vmul.f32 %v230, %v242
        %v254 = vmul.f32 %v231, %v242
        %v255 = vmul.f32 %v232, %v242
        %v256 = vmul.f32 %v233, %v242
        %v257 = vmul.f32 %v234, %v242
        %v258 = vmul.f32 %v235, %v242
        %v259 = vmul.f32 %v236, %v242
        %v260 = vld [vmem:[%s2] sm:$0xff]
        %v261 = vld [vmem:[%s2 + $0x8] sm:$0xff]
        %v262 = vld [vmem:[%s2 + $0x10] sm:$0xff]
        %v263 = vld [vmem:[%s2 + $0x18] sm:$0xff]
        %v264 = vld [vmem:[%s2 + $0x20] sm:$0xff]
        %v265 = vld [vmem:[%s2 + $0x28] sm:$0xff]
        %v266 = vld [vmem:[%s2 + $0x30] sm:$0xff]
        %v267 = vld [vmem:[%s2 + $0x38] sm:$0xff]
        %v268 = vld [vmem:[%s2 + $0x40] sm:$0xff]
        %v269 = vld [vmem:[%s2 + $0x48] sm:$0xff]
        %v270 = vld [vmem:[%s2 + $0x50] sm:$0xff]
        %v271 = vld [vmem:[%s2 + $0x58] sm:$0xff]
        %v272 = vld [vmem:[%s2 + $0x60] sm:$0xff]
        %v273 = vld [vmem:[%s2 + $0x68] sm:$0xff]
        %v274 = vld [vmem:[%s2 + $0x70] sm:$0xff]
        %v275 = vld [vmem:[%s2 + $0x78] sm:$0xff]
        %276 = vmatprep.subr.mxu0 0.0
        %277 = vmatpush1.msra.mxu0 %v260
        %278 = vmatprep.subr.mxu0 0.0
        %279 = vmatpush1.msra.mxu0 %v261
        %280 = vmatprep.subr.mxu0 0.0
        %281 = vmatpush1.msra.mxu0 %v262
        %282 = vmatprep.subr.mxu0 0.0
        %283 = vmatpush1.msra.mxu0 %v263
        %284 = vmatprep.subr.mxu0 0.0
        %285 = vmatpush1.msra.mxu0 %v264
        %286 = vmatprep.subr.mxu0 0.0
        %287 = vmatpush1.msra.mxu0 %v265
        %288 = vmatprep.subr.mxu0 0.0
        %289 = vmatpush1.msra.mxu0 %v266
        %290 = vmatprep.subr.mxu0 0.0
        %291 = vmatpush1.msra.mxu0 %v267
        %292 = vmatprep.subr.mxu0 0.0
        %293 = vmatpush1.msra.mxu0 %v268
        %294 = vmatprep.subr.mxu0 0.0
        %295 = vmatpush1.msra.mxu0 %v269
        %296 = vmatprep.subr.mxu0 0.0
        %297 = vmatpush1.msra.mxu0 %v270
        %298 = vmatprep.subr.mxu0 0.0
        %299 = vmatpush1.msra.mxu0 %v271
        %300 = vmatprep.subr.mxu0 0.0
        %301 = vmatpush1.msra.mxu0 %v272
        %302 = vmatprep.subr.mxu0 0.0
        %303 = vmatpush1.msra.mxu0 %v273
        %304 = vmatprep.subr.mxu0 0.0
        %305 = vmatpush1.msra.mxu0 %v274
        %306 = vmatprep.subr.mxu0 0.0
        %307 = vmatpush1.msra.mxu0 %v275
        %308 = vmatprep.subr.mxu0 0.0
        %309 = vmatpush1.msra.mxu0 0.0
        %310 = vmatprep.subr.mxu0 0.0
        %311 = vmatpush1.msra.mxu0 0.0
        %312 = vmatprep.subr.mxu0 0.0
        %313 = vmatpush1.msra.mxu0 0.0
        %314 = vmatprep.subr.mxu0 0.0
        %315 = vmatpush1.msra.mxu0 0.0
        %316 = vmatprep.subr.mxu0 0.0
        %317 = vmatpush1.msra.mxu0 0.0
        %318 = vmatprep.subr.mxu0 0.0
        %319 = vmatpush1.msra.mxu0 0.0
        %320 = vmatprep.subr.mxu0 0.0
        %321 = vmatpush1.msra.mxu0 0.0
        %322 = vmatprep.subr.mxu0 0.0
        %323 = vmatpush1.msra.mxu0 0.0
        %324 = vmatprep.subr.mxu0 0.0
        %325 = vmatpush1.msra.mxu0 0.0
        %326 = vmatprep.subr.mxu0 0.0
        %327 = vmatpush1.msra.mxu0 0.0
        %328 = vmatprep.subr.mxu0 0.0
        %329 = vmatpush1.msra.mxu0 0.0
        %330 = vmatprep.subr.mxu0 0.0
        %331 = vmatpush1.msra.mxu0 0.0
        %332 = vmatprep.subr.mxu0 0.0
        %333 = vmatpush1.msra.mxu0 0.0
        %334 = vmatprep.subr.mxu0 0.0
        %335 = vmatpush1.msra.mxu0 0.0
        %336 = vmatprep.subr.mxu0 0.0
        %337 = vmatpush1.msra.mxu0 0.0
        %338 = vmatprep.subr.mxu0 0.0
        %339 = vmatpush1.msra.mxu0 0.0
        %340 = vmatprep.mubr.f32.mxu0 0.0
        %341 = vmatmul.mubr.f32.gmra.mrb[0].mxu0 %v244
        %v342 = vpop.f32.mrb[0].mxu0
        %v343 = vadd.f32 0.0, %v342
        %v344 = vpop.f32.mrb[0].mxu0
        %345 = vmatprep.mubr.f32.mxu0 0.0
        %346 = vmatmul.mubr.f32.gmra.mrb[0].mxu0 %v245
        %v347 = vpop.f32.mrb[0].mxu0
        %v348 = vadd.f32 0.0, %v347
        %v349 = vpop.f32.mrb[0].mxu0
        %350 = vmatprep.mubr.f32.mxu0 0.0
        %351 = vmatmul.mubr.f32.gmra.mrb[0].mxu0 %v246
        %v352 = vpop.f32.mrb[0].mxu0
        %v353 = vadd.f32 0.0, %v352
        %v354 = vpop.f32.mrb[0].mxu0
        %355 = vmatprep.mubr.f32.mxu0 0.0
        %356 = vmatmul.mubr.f32.gmra.mrb[0].mxu0 %v247
        %v357 = vpop.f32.mrb[0].mxu0
        %v358 = vadd.f32 0.0, %v357
        %v359 = vpop.f32.mrb[0].mxu0
        %360 = vmatprep.mubr.f32.mxu0 0.0
        %361 = vmatmul.mubr.f32.gmra.mrb[0].mxu0 %v248
        %v362 = vpop.f32.mrb[0].mxu0
        %v363 = vadd.f32 0.0, %v362
        %v364 = vpop.f32.mrb[0].mxu0
        %365 = vmatprep.mubr.f32.mxu0 0.0
        %366 = vmatmul.mubr.f32.gmra.mrb[0].mxu0 %v249
        %v367 = vpop.f32.mrb[0].mxu0
        %v368 = vadd.f32 0.0, %v367
        %v369 = vpop.f32.mrb[0].mxu0
        %370 = vmatprep.mubr.f32.mxu0 0.0
        %371 = vmatmul.mubr.f32.gmra.mrb[0].mxu0 %v250
        %v372 = vpop.f32.mrb[0].mxu0
        %v373 = vadd.f32 0.0, %v372
        %v374 = vpop.f32.mrb[0].mxu0
        %375 = vmatprep.mubr.f32.mxu0 0.0
        %376 = vmatmul.mubr.f32.gmra.mrb[0].mxu0 %v251
        %v377 = vpop.f32.mrb[0].mxu0
        %v378 = vadd.f32 0.0, %v377
        %v379 = vpop.f32.mrb[0].mxu0
        %380 = vmatprep.mubr.f32.mxu0 0.0
        %381 = vmatmul.mubr.f32.gmra.mrb[0].mxu0 %v252
        %v382 = vpop.f32.mrb[0].mxu0
        %v383 = vadd.f32 0.0, %v382
        %v384 = vpop.f32.mrb[0].mxu0
        %385 = vmatprep.mubr.f32.mxu0 0.0
        %386 = vmatmul.mubr.f32.gmra.mrb[0].mxu0 %v253
        %v387 = vpop.f32.mrb[0].mxu0
        %v388 = vadd.f32 0.0, %v387
        %v389 = vpop.f32.mrb[0].mxu0
        %390 = vmatprep.mubr.f32.mxu0 0.0
        %391 = vmatmul.mubr.f32.gmra.mrb[0].mxu0 %v254
        %v392 = vpop.f32.mrb[0].mxu0
        %v393 = vadd.f32 0.0, %v392
        %v394 = vpop.f32.mrb[0].mxu0
        %395 = vmatprep.mubr.f32.mxu0 0.0
        %396 = vmatmul.mubr.f32.gmra.mrb[0].mxu0 %v255
        %v397 = vpop.f32.mrb[0].mxu0
        %v398 = vadd.f32 0.0, %v397
        %v399 = vpop.f32.mrb[0].mxu0
        %400 = vmatprep.mubr.f32.mxu0 0.0
        %401 = vmatmul.mubr.f32.gmra.mrb[0].mxu0 %v256
        %v402 = vpop.f32.mrb[0].mxu0
        %v403 = vadd.f32 0.0, %v402
        %v404 = vpop.f32.mrb[0].mxu0
        %405 = vmatprep.mubr.f32.mxu0 0.0
        %406 = vmatmul.mubr.f32.gmra.mrb[0].mxu0 %v257
        %v407 = vpop.f32.mrb[0].mxu0
        %v408 = vadd.f32 0.0, %v407
        %v409 = vpop.f32.mrb[0].mxu0
        %410 = vmatprep.mubr.f32.mxu0 0.0
        %411 = vmatmul.mubr.f32.gmra.mrb[0].mxu0 %v258
        %v412 = vpop.f32.mrb[0].mxu0
        %v413 = vadd.f32 0.0, %v412
        %v414 = vpop.f32.mrb[0].mxu0
        %415 = vmatprep.mubr.f32.mxu0 0.0
        %416 = vmatmul.mubr.f32.gmra.mrb[0].mxu0 %v259
        %v417 = vpop.f32.mrb[0].mxu0
        %v418 = vadd.f32 0.0, %v417
        %v419 = vpop.f32.mrb[0].mxu0
        %420 = vdwg.mxu0
        %437 = vrot.lane.b32.xlu0 %v343, 118
        %v438 = vpop.permute.xlu0 %437
        %439 = vrot.lane.b32.xlu0 %v348, 118
        %v440 = vpop.permute.xlu0 %439
        %441 = vrot.lane.b32.xlu0 %v353, 118
        %v442 = vpop.permute.xlu0 %441
        %443 = vrot.lane.b32.xlu0 %v358, 118
        %v444 = vpop.permute.xlu0 %443
        %445 = vrot.lane.b32.xlu0 %v363, 118
        %v446 = vpop.permute.xlu0 %445
        %447 = vrot.lane.b32.xlu0 %v368, 118
        %v448 = vpop.permute.xlu0 %447
        %449 = vrot.lane.b32.xlu0 %v373, 118
        %v450 = vpop.permute.xlu0 %449
        %451 = vrot.lane.b32.xlu0 %v378, 118
        %v452 = vpop.permute.xlu0 %451
        %453 = vrot.lane.b32.xlu0 %v383, 118
        %v454 = vpop.permute.xlu0 %453
        %455 = vrot.lane.b32.xlu0 %v388, 118
        %v456 = vpop.permute.xlu0 %455
        %457 = vrot.lane.b32.xlu0 %v393, 118
        %v458 = vpop.permute.xlu0 %457
        %459 = vrot.lane.b32.xlu0 %v398, 118
        %v460 = vpop.permute.xlu0 %459
        %461 = vrot.lane.b32.xlu0 %v403, 118
        %v462 = vpop.permute.xlu0 %461
        %463 = vrot.lane.b32.xlu0 %v408, 118
        %v464 = vpop.permute.xlu0 %463
        %465 = vrot.lane.b32.xlu0 %v413, 118
        %v466 = vpop.permute.xlu0 %465
        %467 = vrot.lane.b32.xlu0 %v418, 118
        %v468 = vpop.permute.xlu0 %467
        %v485 = vmax.f32 %v343, %v438
        %v486 = vmax.f32 %v348, %v440
        %v487 = vmax.f32 %v353, %v442
        %v488 = vmax.f32 %v358, %v444
        %v489 = vmax.f32 %v363, %v446
        %v490 = vmax.f32 %v368, %v448
        %v491 = vmax.f32 %v373, %v450
        %v492 = vmax.f32 %v378, %v452
        %v493 = vmax.f32 %v383, %v454
        %v494 = vmax.f32 %v388, %v456
        %v495 = vmax.f32 %v393, %v458
        %v496 = vmax.f32 %v398, %v460
        %v497 = vmax.f32 %v403, %v462
        %v498 = vmax.f32 %v408, %v464
        %v499 = vmax.f32 %v413, %v466
        %v500 = vmax.f32 %v418, %v468
        %501 = vrot.lane.b32.xlu0 %v343, 108
        %v502 = vpop.permute.xlu0 %501
        %503 = vrot.lane.b32.xlu0 %v348, 108
        %v504 = vpop.permute.xlu0 %503
        %505 = vrot.lane.b32.xlu0 %v353, 108
        %v506 = vpop.permute.xlu0 %505
        %507 = vrot.lane.b32.xlu0 %v358, 108
        %v508 = vpop.permute.xlu0 %507
        %509 = vrot.lane.b32.xlu0 %v363, 108
        %v510 = vpop.permute.xlu0 %509
        %511 = vrot.lane.b32.xlu0 %v368, 108
        %v512 = vpop.permute.xlu0 %511
        %513 = vrot.lane.b32.xlu0 %v373, 108
        %v514 = vpop.permute.xlu0 %513
        %515 = vrot.lane.b32.xlu0 %v378, 108
        %v516 = vpop.permute.xlu0 %515
        %517 = vrot.lane.b32.xlu0 %v383, 108
        %v518 = vpop.permute.xlu0 %517
        %519 = vrot.lane.b32.xlu0 %v388, 108
        %v520 = vpop.permute.xlu0 %519
        %521 = vrot.lane.b32.xlu0 %v393, 108
        %v522 = vpop.permute.xlu0 %521
        %523 = vrot.lane.b32.xlu0 %v398, 108
        %v524 = vpop.permute.xlu0 %523
        %525 = vrot.lane.b32.xlu0 %v403, 108
        %v526 = vpop.permute.xlu0 %525
        %527 = vrot.lane.b32.xlu0 %v408, 108
        %v528 = vpop.permute.xlu0 %527
        %529 = vrot.lane.b32.xlu0 %v413, 108
        %v530 = vpop.permute.xlu0 %529
        %531 = vrot.lane.b32.xlu0 %v418, 108
        %v532 = vpop.permute.xlu0 %531
        %v549 = vmax.f32 %v485, %v502
        %v550 = vmax.f32 %v486, %v504
        %v551 = vmax.f32 %v487, %v506
        %v552 = vmax.f32 %v488, %v508
        %v553 = vmax.f32 %v489, %v510
        %v554 = vmax.f32 %v490, %v512
        %v555 = vmax.f32 %v491, %v514
        %v556 = vmax.f32 %v492, %v516
        %v557 = vmax.f32 %v493, %v518
        %v558 = vmax.f32 %v494, %v520
        %v559 = vmax.f32 %v495, %v522
        %v560 = vmax.f32 %v496, %v524
        %v561 = vmax.f32 %v497, %v526
        %v562 = vmax.f32 %v498, %v528
        %v563 = vmax.f32 %v499, %v530
        %v564 = vmax.f32 %v500, %v532
        %s565 = sld [smem:[#allocation2]]
        %v566 = vstv %s565
        %v567 = vmul.f32 %v549, %v566
        %v568 = vmul.f32 %v550, %v566
        %v569 = vmul.f32 %v551, %v566
        %v570 = vmul.f32 %v552, %v566
        %v571 = vmul.f32 %v553, %v566
        %v572 = vmul.f32 %v554, %v566
        %v573 = vmul.f32 %v555, %v566
        %v574 = vmul.f32 %v556, %v566
        %v575 = vmul.f32 %v557, %v566
        %v576 = vmul.f32 %v558, %v566
        %v577 = vmul.f32 %v559, %v566
        %v578 = vmul.f32 %v560, %v566
        %v579 = vmul.f32 %v561, %v566
        %v580 = vmul.f32 %v562, %v566
        %v581 = vmul.f32 %v563, %v566
        %v582 = vmul.f32 %v564, %v566
        %vm583 = vcmask 80896
        %584 = vst.msk [vmem:[%s219] sm:$0xff] %vm583, %v567
        %585 = vst.msk [vmem:[%s219 + $0x8] sm:$0xff] %vm583, %v568
        %586 = vst.msk [vmem:[%s219 + $0x10] sm:$0xff] %vm583, %v569
        %587 = vst.msk [vmem:[%s219 + $0x18] sm:$0xff] %vm583, %v570
        %588 = vst.msk [vmem:[%s219 + $0x20] sm:$0xff] %vm583, %v571
        %589 = vst.msk [vmem:[%s219 + $0x28] sm:$0xff] %vm583, %v572
        %590 = vst.msk [vmem:[%s219 + $0x30] sm:$0xff] %vm583, %v573
        %591 = vst.msk [vmem:[%s219 + $0x38] sm:$0xff] %vm583, %v574
        %592 = vst.msk [vmem:[%s219 + $0x40] sm:$0xff] %vm583, %v575
        %593 = vst.msk [vmem:[%s219 + $0x48] sm:$0xff] %vm583, %v576
        %594 = vst.msk [vmem:[%s219 + $0x50] sm:$0xff] %vm583, %v577
        %595 = vst.msk [vmem:[%s219 + $0x58] sm:$0xff] %vm583, %v578
        %596 = vst.msk [vmem:[%s219 + $0x60] sm:$0xff] %vm583, %v579
        %597 = vst.msk [vmem:[%s219 + $0x68] sm:$0xff] %vm583, %v580
        %598 = vst.msk [vmem:[%s219 + $0x70] sm:$0xff] %vm583, %v581
        %599 = vst.msk [vmem:[%s219 + $0x78] sm:$0xff] %vm583, %v582
        %s600 = smul.u32 16, %s19
        %p601 = scmp.lt.s32.totalorder %s600, 31
        %s602 = scalar_select %p601, %s600, 31
        %s603 = smul.addr %s602, 8
        %s604 = scalar_lea.vmem %s4, %s603
        // Predicated region
        $region41: #{tpu_custom_call.1} parent=35 // pred_check
          %p605 = pneg %p126
        $region42: #{tpu_custom_call.1} parent=35 // pred_check_branch
          %607 = sbr.rel (%p605) target = $region44
        $region43: #{tpu_custom_call.1} parent=35 // pred_region
          %s608 = smul.u32 16, %s19
        $region44: #{tpu_custom_call.1} parent=35 // pred_fallthru
          _
      $region36: #{tpu_custom_call.1} parent=5 // pred_fallthru
        _
      %p609 = scmp.le.s32.totalorder 2, %s14
      // Predicated region
      $region45: #{tpu_custom_call.1} parent=5 // pred_check
        %p610 = pneg %p609
      $region46: #{tpu_custom_call.1} parent=5 // pred_check_branch
        %612 = sbr.rel (%p610) target = $region48
      $region47: #{tpu_custom_call.1} parent=5 // pred_region
        %s613 = ssub.s32 %s14, 2
        // Predicated region
        $region49: #{tpu_custom_call.1} parent=47 // pred_check
          %p614 = pneg %p132
        $region50: #{tpu_custom_call.1} parent=47 // pred_check_branch
          %616 = sbr.rel (%p614) target = $region52
        $region51: #{tpu_custom_call.1} parent=47 // pred_region
          %s617 = smul.u32 16, %s20
          %p618 = scmp.lt.s32.totalorder %s617, 31
          %s619 = scalar_select %p618, %s617, 31
          %s620 = smul.addr %s619, 8
          %s621 = scalar_lea.vmem %s4, %s620
        $region52: #{tpu_custom_call.1} parent=47 // pred_fallthru
          _
      $region48: #{tpu_custom_call.1} parent=5 // pred_fallthru
        _
    $region6: #{tpu_custom_call.1} parent=1 // loop_footer
      %s18 = sadd.s32 1, %s14
    $region7: #{tpu_custom_call.1} parent=1 // loop_footer_branch
      %13 = sbr.rel target = $region3
    $region8: #{tpu_custom_call.1} parent=1 // loop_exit
      _
    %622 = vsyncpa [#allocation4], 1
    %s623 = scalar_lea.sflag [#allocation4], 1
    %624 = vsyncpa %s623, 1

</llo_original>
